<compile_context>
chip_gen: v7x
topology: tpu7x:2x2x1
jax: 0.10.0
libtpu: 0.0.40
codegen_flags: <defaults>
</compile_context>

<pallas_src>
import jax
import jax.numpy as jnp
from jax import lax
from jax.experimental import pallas as pl
from jax.experimental.pallas import tpu as pltpu


def bert_pooler_kernel(x_ref, w_ref, b_ref, o_ref):
    # x_ref: [B, H]   first-token activations (resident across the grid)
    # w_ref: [TN, H]  weight tile, PyTorch layout (out_features, in_features)
    # b_ref: [1, TN]  bias tile
    # o_ref: [B, TN]  pooled-output tile
    x = x_ref[...]
    w = w_ref[...]
    # y = x @ W^T without materializing a transpose: contract the hidden axis
    # (axis 1) of both operands on the MXU, accumulate in f32.
    y = lax.dot_general(
        x, w,
        dimension_numbers=(((1,), (1,)), ((), ())),
        preferred_element_type=jnp.float32,
    )
    y = y + b_ref[...].astype(jnp.float32)
    o_ref[...] = jnp.tanh(y).astype(o_ref.dtype)


def _num_tensorcores() -> int:
    """Best-effort count of TensorCores on the local device (1 if unknown)."""
    try:
        d = jax.devices()[0]
        n = getattr(d, "num_cores", None)
        if n:
            return max(1, int(n))
        kind = str(getattr(d, "device_kind", "")).lower()
        # Megacore generations expose 2 TensorCores per chip.
        if "v7" in kind or "v5p" in kind or "v4" in kind:
            return 2
    except Exception:
        pass
    return 1


def _pick_num_tiles(hidden_size: int, num_tc: int) -> int:
    # DMA-bound kernel: minimize grid steps.
    #  * 2 TCs (v7x): even 2-way split, each half a multiple of 128 lanes,
    #    so the "parallel" axis puts one weight half on each TensorCore.
    #  * 1 TC (v5e/v6e): single block -> no per-step pipeline overhead.
    if num_tc >= 2 and hidden_size % 256 == 0:
        return 2
    return 1


def _vmem_limit_bytes(B, H, tn, x_bytes, w_bytes, o_bytes, b_bytes):
    # Conservative (8,128)-padded footprint, everything double-buffered.
    def padded(r, c, nbytes):
        return ((r + 7) // 8 * 8) * ((c + 127) // 128 * 128) * nbytes

    need = (2 * padded(tn, H, w_bytes)      # streamed weight tiles
            + 2 * padded(B, H, x_bytes)     # resident activations
            + 2 * padded(B, tn, o_bytes)    # output tiles
            + 2 * padded(1, tn, b_bytes))   # bias tiles
    # 2x margin for Mosaic internal scratch; never below the smallest default
    # (16 MiB on v5e) and never above 32 MiB (half of v7x physical VMEM).
    return int(min(32 * 1024 * 1024, max(16 * 1024 * 1024, 2 * need)))


def bert_pooler(hidden_states, weight, bias, *, num_tiles=None):
    """BertPooler forward.

    hidden_states: [B, S, H]; weight: [H, H] (out_features, in_features);
    bias: [H] -> returns [B, H] = tanh(hidden_states[:, 0] @ W^T + b).
    """
    B, S, H = hidden_states.shape

    # Glue slice; negligible traffic at small/medium batch.
    # TODO(synk): for serving batches (B in the hundreds) pass hidden_states
    # with memory_space=pl.ANY and DMA hbm.at[:, 0, :] in-kernel instead of
    # materializing this slice (saves an extra B*H HBM round-trip).
    first_token = hidden_states[:, 0]
    bias2d = bias.reshape(1, H)

    if num_tiles is None:
        num_tiles = _pick_num_tiles(H, _num_tensorcores())
    # Safety: fall back to a single block if the requested split is not
    # lane/sublane friendly.
    if H % num_tiles != 0 or (num_tiles > 1 and (H // num_tiles) % 128 != 0):
        num_tiles = 1
    tn = H // num_tiles

    x_bytes = hidden_states.dtype.itemsize
    w_bytes = weight.dtype.itemsize
    b_bytes = bias.dtype.itemsize

    cost = pl.CostEstimate(
        flops=2 * B * H * H,
        transcendentals=B * H,
        bytes_accessed=H * H * w_bytes + 2 * B * H * x_bytes + H * b_bytes,
    )

    return pl.pallas_call(
        bert_pooler_kernel,
        out_shape=jax.ShapeDtypeStruct((B, H), hidden_states.dtype),
        grid_spec=pltpu.PrefetchScalarGridSpec(
            num_scalar_prefetch=0,
            grid=(num_tiles,),
            in_specs=[
                # Activations: small, resident across all weight tiles.
                pl.BlockSpec((B, H), lambda j: (0, 0)),
                # Weight: streamed in output-feature tiles (double-buffered).
                pl.BlockSpec((tn, H), lambda j: (j, 0)),
                # Bias tile matching the output-feature tile.
                pl.BlockSpec((1, tn), lambda j: (0, j)),
            ],
            out_specs=pl.BlockSpec((B, tn), lambda j: (0, j)),
        ),
        compiler_params=pltpu.CompilerParams(
            # Independent output-feature tiles -> shard across TCs on v7x.
            dimension_semantics=("parallel",),
            vmem_limit_bytes=_vmem_limit_bytes(
                B, H, tn, x_bytes, w_bytes, x_bytes, b_bytes),
        ),
        cost_estimate=cost,
    )(first_token, weight, bias2d)


if __name__ == "__main__":
    # Small BertPooler-shaped test (fallback tn=H path).
    B, S, H = 2, 8, 32
    key = jax.random.PRNGKey(0)
    k1, k2, k3 = jax.random.split(key, 3)
    hidden_states = jax.random.normal(k1, (B, S, H), dtype=jnp.float32)
    weight = jax.random.normal(k2, (H, H), dtype=jnp.float32) * 0.02
    bias = jax.random.normal(k3, (H,), dtype=jnp.float32) * 0.02

    out = bert_pooler(hidden_states, weight, bias)
    jax.block_until_ready(out)
    ref = jnp.tanh(hidden_states[:, 0] @ weight.T + bias)
    assert out.shape == (B, H)
    assert jnp.allclose(out, ref, atol=1e-5, rtol=1e-5)

    # Explicitly exercise the 2-tile (v7x-style even split) path so the tiling
    # math is validated regardless of which TPU generation runs this.
    B2, S2, H2 = 2, 4, 256
    k4, k5, k6 = jax.random.split(jax.random.PRNGKey(0), 3)
    hs2 = jax.random.normal(k4, (B2, S2, H2), dtype=jnp.float32)
    w2 = jax.random.normal(k5, (H2, H2), dtype=jnp.float32) * 0.02
    b2 = jax.random.normal(k6, (H2,), dtype=jnp.float32) * 0.02

    out2 = bert_pooler(hs2, w2, b2, num_tiles=2)
    jax.block_until_ready(out2)
    ref2 = jnp.tanh(hs2[:, 0] @ w2.T + b2)
    assert out2.shape == (B2, H2)
    assert jnp.allclose(out2, ref2, atol=1e-5, rtol=1e-5)

    print("KERNEL_OK")
</pallas_src>

<mosaic_0001>
module attributes {stable_mosaic.version = 11 : i64} {
  func.func @bert_pooler_kernel(%arg0: i32, %arg1: memref<2x32xf32, #tpu.memory_space<vmem>>, %arg2: memref<32x32xf32, #tpu.memory_space<vmem>>, %arg3: memref<1x32xf32, #tpu.memory_space<vmem>>, %arg4: memref<2x32xf32, #tpu.memory_space<vmem>>) attributes {dimension_semantics = [#tpu.dimension_semantics<parallel>], iteration_bounds = array<i64: 1>, scalar_prefetch = 0 : i64, scratch_operands = 0 : i64, tpu.core_type = #tpu.core_type<tc>, window_params = [{pipeline_mode = #tpu.pipeline_mode<synchronous>, transform_indices = @transform_0, window_bounds = array<i64: 2, 32>}, {transform_indices = @transform_1, window_bounds = array<i64: 32, 32>}, {transform_indices = @transform_2, window_bounds = array<i64: 1, 32>}, {transform_indices = @transform_3, window_bounds = array<i64: 2, 32>}]} {
    %c0 = arith.constant 0 : index
    %c0_0 = arith.constant 0 : index
    %0 = vector.load %arg1[%c0, %c0_0] : memref<2x32xf32, #tpu.memory_space<vmem>>, vector<2x32xf32>
    %c0_1 = arith.constant 0 : index
    %c0_2 = arith.constant 0 : index
    %1 = vector.load %arg2[%c0_1, %c0_2] : memref<32x32xf32, #tpu.memory_space<vmem>>, vector<32x32xf32>
    %cst = arith.constant dense<0.000000e+00> : vector<2x32xf32>
    %2 = tpu.matmul %0, %1, %cst {dimension_numbers = #tpu.dot_dimension_numbers<[1], [1], [0], [0], [0, 0, 1, 0], [], []>} : vector<2x32xf32>, vector<32x32xf32>, vector<2x32xf32> -> vector<2x32xf32>
    %c0_3 = arith.constant 0 : index
    %c0_4 = arith.constant 0 : index
    %3 = vector.load %arg3[%c0_3, %c0_4] : memref<1x32xf32, #tpu.memory_space<vmem>>, vector<1x32xf32>
    %4 = vector.broadcast %3 : vector<1x32xf32> to vector<2x32xf32>
    %5 = arith.addf %2, %4 : vector<2x32xf32>
    %6 = math.tanh %5 : vector<2x32xf32>
    %c0_5 = arith.constant 0 : index
    %c0_6 = arith.constant 0 : index
    %7 = vector.load %arg4[%c0_5, %c0_6] : memref<2x32xf32, #tpu.memory_space<vmem>>, vector<2x32xf32>
    tpu.vector_store %arg4[%c0_5, %c0_6], %6 {strides = array<i32>} : memref<2x32xf32, #tpu.memory_space<vmem>>, vector<2x32xf32>,
    return
  }
  func.func @transform_0(%arg0: i32) -> (i32, i32) {
    %c0_i32 = arith.constant 0 : i32
    %c0_i32_0 = arith.constant 0 : i32
    %c0_i32_1 = arith.constant 0 : i32
    return %c0_i32, %c0_i32_0 : i32, i32
  }
  func.func @transform_1(%arg0: i32) -> (i32, i32) {
    %c0_i32 = arith.constant 0 : i32
    %c0_i32_0 = arith.constant 0 : i32
    return %arg0, %c0_i32 : i32, i32
  }
  func.func @transform_2(%arg0: i32) -> (i32, i32) {
    %c0_i32 = arith.constant 0 : i32
    %c0_i32_0 = arith.constant 0 : i32
    return %c0_i32, %arg0 : i32, i32
  }
  func.func @transform_3(%arg0: i32) -> (i32, i32) {
    %c0_i32 = arith.constant 0 : i32
    %c0_i32_0 = arith.constant 0 : i32
    return %c0_i32, %arg0 : i32, i32
  }
}

</mosaic_0001>

<llo_original>
// kernel: tpu_custom_call.1
$region0: #{tpu_custom_call.1}
  #allocation0 [shape = 'u32[]', space=smem, size = 0x4, offset = 0x4, fixed_abs, tag = 'smem constant byte address 0x4 - core index']
  #allocation1 [shape = 'u32[144,128]{1,0:T(1,128)}', space=vmem, size = 0x12000, scoped, tag = 'internal scratch']
  %s0 = inlined_call_operand.hbm [shape: f32[2,32], index: 0, kind: input, shape index: {}]
  %s1 = inlined_call_operand.hbm [shape: f32[32,32], index: 1, kind: input, shape index: {}]
  %s2 = inlined_call_operand.vmem [shape: f32[1,32], index: 2, kind: input, shape index: {}]
  %s3 = inlined_call_operand.hbm [shape: f32[2,32], index: 3, kind: output, shape index: {}]
  %s4 = sld [smem:[#allocation0]]
  $region30: #{tpu_custom_call.1} parent=0
    _
  %s6 = ssub.s32 1, %s4
  %s7 = scalar_select 0, %s6, %s4
  $region1: #{tpu_custom_call.1} parent=0
    #allocation2 [shape = 'u8[1024]{0}', space=vmem, size = 0x400, scoped, tag = 'input window, operand 0, single buffered']
    #allocation3 [shape = 's32[1]{0}', space=sflag, size = 0x4, scoped, tag = 'scoped memory for tpu_custom_call.1']
    #allocation4 [shape = 's32[1]{0}', space=sflag, size = 0x4, scoped, tag = 'scoped memory for tpu_custom_call.1']
    #allocation5 [shape = 'u8[16384]{0}', space=vmem, size = 0x4000, scoped, tag = 'input window, operand 1, single buffered']
    #allocation6 [shape = 's32[1]{0}', space=sflag, size = 0x4, scoped, tag = 'scoped memory for tpu_custom_call.1']
    #allocation7 [shape = 'u8[1024]{0}', space=vmem, size = 0x400, scoped, tag = 'output window, operand 0, single buffered']
    %8 = vsyncpa [#allocation3], 0
    %9 = vsyncpa [#allocation6], 0
    %10 = vsyncpa [#allocation4], 0
    // Predicated region
    $region2: #{tpu_custom_call.1} parent=1 // pred_check
      _
    $region3: #{tpu_custom_call.1} parent=1 // pred_check_branch
      %12 = sbr.rel (0) target = $region5
    $region4: #{tpu_custom_call.1} parent=1 // pred_region
      %s14 = ssub.s32 32, 32
      %15 = vsyncadd [#allocation3], %s14
      %s17 = sshll.u32 [#allocation2], 4
      %s18 = int_to_ptr.vmem [resolvable:$true] %s17
      %20 = dma.hbm_to_vmem [thread:$0]  %s0, 32, %s18, [#allocation3]
    $region5: #{tpu_custom_call.1} parent=1 // pred_fallthru
      _
    // Predicated region
    $region6: #{tpu_custom_call.1} parent=1 // pred_check
      _
    $region7: #{tpu_custom_call.1} parent=1 // pred_check_branch
      %22 = sbr.rel (0) target = $region9
    $region8: #{tpu_custom_call.1} parent=1 // pred_region
      %s24 = ssub.s32 512, 512
      %25 = vsyncadd [#allocation6], %s24
      %s26 = sshll.u32 [#allocation5], 4
      %s27 = int_to_ptr.vmem [resolvable:$true] %s26
      %32 = dma.hbm_to_vmem [thread:$0]  %s1, 512, %s27, [#allocation6], 128, 128, 8
    $region9: #{tpu_custom_call.1} parent=1 // pred_fallthru
      _
    // Predicated region
    $region10: #{tpu_custom_call.1} parent=1 // pred_check
      _
    $region11: #{tpu_custom_call.1} parent=1 // pred_check_branch
      %34 = sbr.rel (0) target = $region13
    $region12: #{tpu_custom_call.1} parent=1 // pred_region
      _
    $region13: #{tpu_custom_call.1} parent=1 // pred_fallthru
      _
    // Predicated region
    $region14: #{tpu_custom_call.1} parent=1 // pred_check
      _
    $region15: #{tpu_custom_call.1} parent=1 // pred_check_branch
      %36 = sbr.rel (0) target = $region17
    $region16: #{tpu_custom_call.1} parent=1 // pred_region
      %37 = dma.done [#allocation3], 32
    $region17: #{tpu_custom_call.1} parent=1 // pred_fallthru
      _
    // Predicated region
    $region18: #{tpu_custom_call.1} parent=1 // pred_check
      _
    $region19: #{tpu_custom_call.1} parent=1 // pred_check_branch
      %39 = sbr.rel (0) target = $region21
    $region20: #{tpu_custom_call.1} parent=1 // pred_region
      %40 = dma.done [#allocation6], 512
    $region21: #{tpu_custom_call.1} parent=1 // pred_fallthru
      _
    %v41 = vld [vmem:[#allocation2] sm:$0x3]
    %v42 = vld [vmem:[#allocation5] sm:$0xff]
    %v43 = vld [vmem:[#allocation5 + $0x8] sm:$0xff]
    %v44 = vld [vmem:[#allocation5 + $0x10] sm:$0xff]
    %v45 = vld [vmem:[#allocation5 + $0x18] sm:$0xff]
    %v46 = vld [vmem:[%s2] sm:$0x1]
    %v48 = vlaneseq
    %v49 = vshrl.u32 %v48, 7
    %v50 = vsub.s32 0, %v49
    %v51 = vrot.slane %v46, %v50
    %vm53 = vcmask 261120
    %v55 = vsel %vm53, %v41, 0
    %v58 = vsel %vm53, %v42, 0
    %v61 = vsel %vm53, %v43, 0
    %v64 = vsel %vm53, %v44, 0
    %v67 = vsel %vm53, %v45, 0
    %69 = vmatprep.subr.mxu0 0.0
    %70 = vmatpush1.xpose.msra.mxu0 %v58
    %71 = vmatprep.subr.mxu0 0.0
    %72 = vmatpush1.xpose.msra.mxu0 %v61
    %73 = vmatprep.subr.mxu0 0.0
    %74 = vmatpush1.xpose.msra.mxu0 %v64
    %75 = vmatprep.subr.mxu0 0.0
    %76 = vmatpush1.xpose.msra.mxu0 %v67
    %77 = vmatprep.subr.mxu0 0.0
    %78 = vmatpush1.xpose.msra.mxu0 0.0
    %79 = vmatprep.subr.mxu0 0.0
    %80 = vmatpush1.xpose.msra.mxu0 0.0
    %81 = vmatprep.subr.mxu0 0.0
    %82 = vmatpush1.xpose.msra.mxu0 0.0
    %83 = vmatprep.subr.mxu0 0.0
    %84 = vmatpush1.xpose.msra.mxu0 0.0
    %85 = vmatprep.subr.mxu0 0.0
    %86 = vmatpush1.xpose.msra.mxu0 0.0
    %87 = vmatprep.subr.mxu0 0.0
    %88 = vmatpush1.xpose.msra.mxu0 0.0
    %89 = vmatprep.subr.mxu0 0.0
    %90 = vmatpush1.xpose.msra.mxu0 0.0
    %91 = vmatprep.subr.mxu0 0.0
    %92 = vmatpush1.xpose.msra.mxu0 0.0
    %93 = vmatprep.subr.mxu0 0.0
    %94 = vmatpush1.xpose.msra.mxu0 0.0
    %95 = vmatprep.subr.mxu0 0.0
    %96 = vmatpush1.xpose.msra.mxu0 0.0
    %97 = vmatprep.subr.mxu0 0.0
    %98 = vmatpush1.xpose.msra.mxu0 0.0
    %99 = vmatprep.subr.mxu0 0.0
    %100 = vmatpush1.xpose.msra.mxu0 0.0
    %101 = vmatprep.subr.mxu0 0.0
    %102 = vmatpush1.xpose.msra.mxu0 0.0
    %103 = vmatprep.subr.mxu0 0.0
    %104 = vmatpush1.xpose.msra.mxu0 0.0
    %105 = vmatprep.subr.mxu0 0.0
    %106 = vmatpush1.xpose.msra.mxu0 0.0
    %107 = vmatprep.subr.mxu0 0.0
    %108 = vmatpush1.xpose.msra.mxu0 0.0
    %109 = vmatprep.subr.mxu0 0.0
    %110 = vmatpush1.xpose.msra.mxu0 0.0
    %111 = vmatprep.subr.mxu0 0.0
    %112 = vmatpush1.xpose.msra.mxu0 0.0
    %113 = vmatprep.subr.mxu0 0.0
    %114 = vmatpush1.xpose.msra.mxu0 0.0
    %115 = vmatprep.subr.mxu0 0.0
    %116 = vmatpush1.xpose.msra.mxu0 0.0
    %117 = vmatprep.subr.mxu0 0.0
    %118 = vmatpush1.xpose.msra.mxu0 0.0
    %119 = vmatprep.subr.mxu0 0.0
    %120 = vmatpush1.xpose.msra.mxu0 0.0
    %121 = vmatprep.subr.mxu0 0.0
    %122 = vmatpush1.xpose.msra.mxu0 0.0
    %123 = vmatprep.subr.mxu0 0.0
    %124 = vmatpush1.xpose.msra.mxu0 0.0
    %125 = vmatprep.subr.mxu0 0.0
    %126 = vmatpush1.xpose.msra.mxu0 0.0
    %127 = vmatprep.subr.mxu0 0.0
    %128 = vmatpush1.xpose.msra.mxu0 0.0
    %129 = vmatprep.subr.mxu0 0.0
    %130 = vmatpush1.xpose.msra.mxu0 0.0
    %131 = vmatprep.subr.mxu0 0.0
    %132 = vmatpush1.xpose.msra.mxu0 0.0
    %133 = vmatprep.mubr.f32.mxu0 0.0
    %134 = vmatmul.mubr.f32.gmra.mrb[0].mxu0 %v55
    %v135 = vpop.f32.mrb[0].mxu0
    %v136 = vadd.f32 %v51, %v135
    %v137 = vpop.f32.mrb[0].mxu0
    %138 = vdwg.mxu0
    %v139 = vtanh.pop %v136
    %vm140 = vcmask 254976
    %141 = vst.msk [vmem:[#allocation7] sm:$0x3] %vm140, %v139
    // Predicated region
    $region22: #{tpu_custom_call.1} parent=1 // pred_check
      _
    $region23: #{tpu_custom_call.1} parent=1 // pred_check_branch
      %143 = sbr.rel (0) target = $region25
    $region24: #{tpu_custom_call.1} parent=1 // pred_region
      %s145 = ssub.s32 32, 32
      %146 = vsyncadd [#allocation4], %s145
      %s148 = sshll.u32 [#allocation7], 4
      %s149 = int_to_ptr.vmem [resolvable:$true] %s148
      %151 = dma.vmem_to_hbm [thread:$0]  %s149, 32, %s3, [#allocation4]
    $region25: #{tpu_custom_call.1} parent=1 // pred_fallthru
      _
    // Predicated region
    $region26: #{tpu_custom_call.1} parent=1 // pred_check
      _
    $region27: #{tpu_custom_call.1} parent=1 // pred_check_branch
      %153 = sbr.rel (0) target = $region29
    $region28: #{tpu_custom_call.1} parent=1 // pred_region
      %154 = dma.done [#allocation4], 32
    $region29: #{tpu_custom_call.1} parent=1 // pred_fallthru
      _
    %155 = vsyncpa [#allocation3], 1
    %156 = vsyncpa [#allocation6], 1
    %157 = vsyncpa [#allocation4], 1

</llo_original>
